<compile_context>
chip_gen: v7x
topology: tpu7x:2x2x1
jax: 0.10.0
libtpu: 0.0.40
codegen_flags: <defaults>
</compile_context>

<pallas_src>
from functools import partial

import jax
import jax.numpy as jnp
from jax import lax
from jax.experimental import pallas as pl
from jax.experimental.pallas import tpu as pltpu

EPS = 1e-5
NEG_SLOPE = 0.01  # F.leaky_relu default
_UNROLL_MAX_PASSES = 8


def _recurrent_mlp_kernel(x_ref, wf_ref, vec_ref, wr_ref, wh_ref, bh_ref, out_ref,
                          *, n_passes):
    n = x_ref.shape[0]
    inv_n = 1.0 / float(n)

    # first: Linear(in_channels, width) with bias (bf16 MXU operands, f32 accumulate).
    # h is carried across passes in bf16; BN stats / affine math stays in f32.
    h_bf = (jnp.dot(x_ref[...], wf_ref[...], preferred_element_type=jnp.float32)
            + vec_ref[0:1, :]).astype(jnp.bfloat16)

    w_rec = wr_ref[...]  # identical every pass -> load once, compiler keeps it resident

    def one_pass(p, h_bf):
        # rec: Linear(width, width, bias=False) on the MXU
        h = jnp.dot(h_bf, w_rec, preferred_element_type=jnp.float32)
        # act: leaky_relu as a single vmax (valid since NEG_SLOPE < 1)
        h = jnp.maximum(h, NEG_SLOPE * h)

        # BatchNorm1d (training-mode batch stats): genuine-f32 sublane reductions,
        # keeps the MXU free for the recurrent dots.
        mean = jnp.sum(h, axis=0, keepdims=True) * inv_n
        msq = jnp.sum(h * h, axis=0, keepdims=True) * inv_n
        var = jnp.maximum(msq - mean * mean, 0.0)  # guard cancellation

        gamma = vec_ref[pl.ds(1 + p, 1), :]
        beta = vec_ref[pl.ds(1 + n_passes + p, 1), :]
        scale = gamma * lax.rsqrt(var + EPS)
        shift = beta - mean * scale
        # fold normalize + affine + cast-for-next-dot into one elementwise pass
        return (h * scale + shift).astype(jnp.bfloat16)
        # drop: Dropout(0) == Identity

    if n_passes <= _UNROLL_MAX_PASSES:
        for p in range(n_passes):
            h_bf = one_pass(p, h_bf)
    else:
        h_bf = lax.fori_loop(0, n_passes, one_pass, h_bf)

    # head: Linear(width, out_channels) with bias; lane-dense padded bf16 output
    out_ref[...] = (jnp.dot(h_bf, wh_ref[...], preferred_element_type=jnp.float32)
                    + bh_ref[...]).astype(out_ref.dtype)


def _pad_to(a, shape):
    pads = [(0, t - s) for s, t in zip(a.shape, shape)]
    return jnp.pad(a, pads)


def _vmem_limit_bytes():
    cap = 64 * 1024 * 1024  # conservative fallback (v7x physical VMEM)
    try:
        info = pltpu.get_tpu_info()
        cap = int(getattr(info, "vmem_capacity_bytes", cap))
    except Exception:
        pass
    # ~51 MiB on v7x (64 MiB physical), ~102 MiB on v5e/v6e (128 MiB physical)
    return int(0.8 * cap)


def recurrent_mlp(x, w_first, b_first, w_rec, gamma, beta, w_head, b_head, *, n_passes):
    n, in_channels = x.shape
    width = w_rec.shape[0]
    out_channels = w_head.shape[1]

    w_pad = pl.cdiv(width, 128) * 128           # lane-dense feature width
    out_pad = pl.cdiv(out_channels, 128) * 128  # lane-dense output width

    # bf16 matmul operands, zero-padded to lane-dense widths. Padded feature lanes
    # carry exact zeros through leaky-ReLU / BN (gamma/beta pad lanes = 0 ->
    # scale = shift = 0), so the real lanes are bit-identical to the unpadded run.
    x_bf = x.astype(jnp.bfloat16)
    wf_bf = _pad_to(w_first.astype(jnp.bfloat16), (in_channels, w_pad))
    wr_bf = _pad_to(w_rec.astype(jnp.bfloat16), (w_pad, w_pad))
    wh_bf = _pad_to(w_head.astype(jnp.bfloat16), (w_pad, out_pad))
    bh_pad = _pad_to(b_head.reshape(1, out_channels).astype(jnp.float32), (1, out_pad))

    # pack all (width,)-sized per-feature vectors into one f32 operand:
    #   row 0: b_first, rows 1..n_passes: gamma, rows 1+n_passes..: beta
    vecs = jnp.concatenate([b_first.reshape(1, width).astype(jnp.float32),
                            gamma.reshape(n_passes, width).astype(jnp.float32),
                            beta.reshape(n_passes, width).astype(jnp.float32)], axis=0)
    vecs = _pad_to(vecs, (1 + 2 * n_passes, w_pad))

    operands = (x_bf, wf_bf, vecs, wr_bf, wh_bf, bh_pad)
    vmem = pl.BlockSpec(memory_space=pltpu.MemorySpace.VMEM)

    kernel = partial(_recurrent_mlp_kernel, n_passes=n_passes)
    out_padded = pl.pallas_call(
        kernel,
        out_shape=jax.ShapeDtypeStruct((n, out_pad), jnp.bfloat16),
        in_specs=[vmem] * len(operands),
        out_specs=vmem,
        compiler_params=pltpu.CompilerParams(vmem_limit_bytes=_vmem_limit_bytes()),
    )(*operands)
    # widen the padded bf16 head output back to f32, drop padding lanes
    return out_padded[:, :out_channels].astype(jnp.float32)


def recurrent_mlp_ref(x, w_first, b_first, w_rec, gamma, beta, w_head, b_head, *, n_passes):
    """Pure-JAX f32 reference mirroring the PyTorch forward (training-mode BN)."""
    h = x @ w_first + b_first
    for p in range(n_passes):
        h = h @ w_rec
        h = jnp.where(h >= 0, h, NEG_SLOPE * h)
        mean = jnp.mean(h, axis=0, keepdims=True)
        var = jnp.mean((h - mean) ** 2, axis=0, keepdims=True)
        h = (h - mean) / jnp.sqrt(var + EPS)
        h = h * gamma[p:p + 1, :] + beta[p:p + 1, :]
    return h @ w_head + b_head


if __name__ == "__main__":
    # Small shapes consistent with the module: x is (batch, in_channels).
    batch = 16
    in_channels = 8
    width = 32
    out_channels = 4
    n_passes = 3

    key = jax.random.PRNGKey(0)
    ks = jax.random.split(key, 7)

    x = jax.random.normal(ks[0], (batch, in_channels), dtype=jnp.float32)

    # Deterministic parameter init (shapes follow the module's __init__).
    w_first = jax.random.normal(ks[1], (in_channels, width), dtype=jnp.float32) * 0.2
    b_first = jax.random.normal(ks[2], (1, width), dtype=jnp.float32) * 0.1
    w_rec = jax.random.normal(ks[3], (width, width), dtype=jnp.float32) * 0.2  # bias=False (bn=True)
    gamma = 1.0 + 0.1 * jax.random.normal(ks[4], (n_passes, width), dtype=jnp.float32)
    beta = 0.1 * jax.random.normal(ks[5], (n_passes, width), dtype=jnp.float32)
    w_head = jax.random.normal(ks[6], (width, out_channels), dtype=jnp.float32) * 0.2
    b_head = jnp.zeros((1, out_channels), dtype=jnp.float32)

    out = recurrent_mlp(x, w_first, b_first, w_rec, gamma, beta, w_head, b_head,
                        n_passes=n_passes)
    out = jax.block_until_ready(out)

    ref = recurrent_mlp_ref(x, w_first, b_first, w_rec, gamma, beta, w_head, b_head,
                            n_passes=n_passes)
    assert out.shape == (batch, out_channels)
    # bf16 matmul operands / bf16 head output (f32 accumulation, f32 BN stats)
    # -> slightly looser tolerance vs the pure-f32 reference
    assert jnp.allclose(out, ref, atol=5e-2, rtol=5e-2), "kernel/reference mismatch"

    print("KERNEL_OK")
</pallas_src>

<mosaic_0001>
module attributes {stable_mosaic.version = 11 : i64} {
  func.func @_recurrent_mlp_kernel(%arg0: memref<16x8xbf16, #tpu.memory_space<vmem>>, %arg1: memref<8x128xbf16, #tpu.memory_space<vmem>>, %arg2: memref<7x128xf32, #tpu.memory_space<vmem>>, %arg3: memref<128x128xbf16, #tpu.memory_space<vmem>>, %arg4: memref<128x128xbf16, #tpu.memory_space<vmem>>, %arg5: memref<1x128xf32, #tpu.memory_space<vmem>>, %arg6: memref<16x128xbf16, #tpu.memory_space<vmem>>) attributes {dimension_semantics = [], scalar_prefetch = 0 : i64, scratch_operands = 0 : i64, tpu.core_type = #tpu.core_type<tc>} {
    %c0 = arith.constant 0 : index
    %c0_0 = arith.constant 0 : index
    %0 = vector.load %arg0[%c0, %c0_0] : memref<16x8xbf16, #tpu.memory_space<vmem>>, vector<16x8xbf16>
    %c0_1 = arith.constant 0 : index
    %c0_2 = arith.constant 0 : index
    %1 = vector.load %arg1[%c0_1, %c0_2] : memref<8x128xbf16, #tpu.memory_space<vmem>>, vector<8x128xbf16>
    %cst = arith.constant dense<0.000000e+00> : vector<16x128xf32>
    %2 = tpu.matmul %0, %1, %cst {dimension_numbers = #tpu.dot_dimension_numbers<[1], [0], [0], [1], [0, 0, 1, 1], [], []>} : vector<16x8xbf16>, vector<8x128xbf16>, vector<16x128xf32> -> vector<16x128xf32>
    %c0_3 = arith.constant 0 : index
    %c0_4 = arith.constant 0 : index
    %3 = vector.load %arg2[%c0_3, %c0_4] : memref<7x128xf32, #tpu.memory_space<vmem>>, vector<1x128xf32>
    %4 = vector.broadcast %3 : vector<1x128xf32> to vector<16x128xf32>
    %5 = arith.addf %2, %4 : vector<16x128xf32>
    %6 = arith.truncf %5 : vector<16x128xf32> to vector<16x128xbf16>
    %c0_5 = arith.constant 0 : index
    %c0_6 = arith.constant 0 : index
    %7 = vector.load %arg3[%c0_5, %c0_6] : memref<128x128xbf16, #tpu.memory_space<vmem>>, vector<128x128xbf16>
    %cst_7 = arith.constant dense<0.000000e+00> : vector<16x128xf32>
    %8 = tpu.matmul %6, %7, %cst_7 {dimension_numbers = #tpu.dot_dimension_numbers<[1], [0], [0], [1], [0, 0, 1, 1], [], []>} : vector<16x128xbf16>, vector<128x128xbf16>, vector<16x128xf32> -> vector<16x128xf32>
    %cst_8 = arith.constant 0.00999999977 : f32
    %9 = vector.broadcast %cst_8 : f32 to vector<16x128xf32>
    %10 = arith.mulf %9, %8 : vector<16x128xf32>
    %11 = arith.maximumf %8, %10 : vector<16x128xf32>
    %cst_9 = arith.constant dense<0.000000e+00> : vector<128xf32>
    %12 = vector.multi_reduction <add>, %11, %cst_9 [0] : vector<16x128xf32> to vector<128xf32>
    %13 = vector.shape_cast %12 : vector<128xf32> to vector<1x128xf32>
    %cst_10 = arith.constant 6.250000e-02 : f32
    %14 = vector.broadcast %cst_10 : f32 to vector<1x128xf32>
    %15 = arith.mulf %13, %14 : vector<1x128xf32>
    %16 = arith.mulf %11, %11 : vector<16x128xf32>
    %cst_11 = arith.constant dense<0.000000e+00> : vector<128xf32>
    %17 = vector.multi_reduction <add>, %16, %cst_11 [0] : vector<16x128xf32> to vector<128xf32>
    %18 = vector.shape_cast %17 : vector<128xf32> to vector<1x128xf32>
    %cst_12 = arith.constant 6.250000e-02 : f32
    %19 = vector.broadcast %cst_12 : f32 to vector<1x128xf32>
    %20 = arith.mulf %18, %19 : vector<1x128xf32>
    %21 = arith.mulf %15, %15 : vector<1x128xf32>
    %22 = arith.subf %20, %21 : vector<1x128xf32>
    %cst_13 = arith.constant 0.000000e+00 : f32
    %23 = vector.broadcast %cst_13 : f32 to vector<1x128xf32>
    %24 = arith.maximumf %22, %23 : vector<1x128xf32>
    %c1 = arith.constant 1 : index
    %c0_14 = arith.constant 0 : index
    %25 = vector.load %arg2[%c1, %c0_14] : memref<7x128xf32, #tpu.memory_space<vmem>>, vector<1x128xf32>
    %c4 = arith.constant 4 : index
    %c0_15 = arith.constant 0 : index
    %26 = vector.load %arg2[%c4, %c0_15] : memref<7x128xf32, #tpu.memory_space<vmem>>, vector<1x128xf32>
    %cst_16 = arith.constant 9.99999974E-6 : f32
    %27 = vector.broadcast %cst_16 : f32 to vector<1x128xf32>
    %28 = arith.addf %24, %27 : vector<1x128xf32>
    %29 = math.rsqrt %28 : vector<1x128xf32>
    %30 = arith.mulf %25, %29 : vector<1x128xf32>
    %31 = arith.mulf %15, %30 : vector<1x128xf32>
    %32 = arith.subf %26, %31 : vector<1x128xf32>
    %33 = vector.broadcast %30 : vector<1x128xf32> to vector<16x128xf32>
    %34 = arith.mulf %11, %33 : vector<16x128xf32>
    %35 = vector.broadcast %32 : vector<1x128xf32> to vector<16x128xf32>
    %36 = arith.addf %34, %35 : vector<16x128xf32>
    %37 = arith.truncf %36 : vector<16x128xf32> to vector<16x128xbf16>
    %cst_17 = arith.constant dense<0.000000e+00> : vector<16x128xf32>
    %38 = tpu.matmul %37, %7, %cst_17 {dimension_numbers = #tpu.dot_dimension_numbers<[1], [0], [0], [1], [0, 0, 1, 1], [], []>} : vector<16x128xbf16>, vector<128x128xbf16>, vector<16x128xf32> -> vector<16x128xf32>
    %cst_18 = arith.constant 0.00999999977 : f32
    %39 = vector.broadcast %cst_18 : f32 to vector<16x128xf32>
    %40 = arith.mulf %39, %38 : vector<16x128xf32>
    %41 = arith.maximumf %38, %40 : vector<16x128xf32>
    %cst_19 = arith.constant dense<0.000000e+00> : vector<128xf32>
    %42 = vector.multi_reduction <add>, %41, %cst_19 [0] : vector<16x128xf32> to vector<128xf32>
    %43 = vector.shape_cast %42 : vector<128xf32> to vector<1x128xf32>
    %cst_20 = arith.constant 6.250000e-02 : f32
    %44 = vector.broadcast %cst_20 : f32 to vector<1x128xf32>
    %45 = arith.mulf %43, %44 : vector<1x128xf32>
    %46 = arith.mulf %41, %41 : vector<16x128xf32>
    %cst_21 = arith.constant dense<0.000000e+00> : vector<128xf32>
    %47 = vector.multi_reduction <add>, %46, %cst_21 [0] : vector<16x128xf32> to vector<128xf32>
    %48 = vector.shape_cast %47 : vector<128xf32> to vector<1x128xf32>
    %cst_22 = arith.constant 6.250000e-02 : f32
    %49 = vector.broadcast %cst_22 : f32 to vector<1x128xf32>
    %50 = arith.mulf %48, %49 : vector<1x128xf32>
    %51 = arith.mulf %45, %45 : vector<1x128xf32>
    %52 = arith.subf %50, %51 : vector<1x128xf32>
    %cst_23 = arith.constant 0.000000e+00 : f32
    %53 = vector.broadcast %cst_23 : f32 to vector<1x128xf32>
    %54 = arith.maximumf %52, %53 : vector<1x128xf32>
    %c2 = arith.constant 2 : index
    %c0_24 = arith.constant 0 : index
    %55 = vector.load %arg2[%c2, %c0_24] : memref<7x128xf32, #tpu.memory_space<vmem>>, vector<1x128xf32>
    %c5 = arith.constant 5 : index
    %c0_25 = arith.constant 0 : index
    %56 = vector.load %arg2[%c5, %c0_25] : memref<7x128xf32, #tpu.memory_space<vmem>>, vector<1x128xf32>
    %cst_26 = arith.constant 9.99999974E-6 : f32
    %57 = vector.broadcast %cst_26 : f32 to vector<1x128xf32>
    %58 = arith.addf %54, %57 : vector<1x128xf32>
    %59 = math.rsqrt %58 : vector<1x128xf32>
    %60 = arith.mulf %55, %59 : vector<1x128xf32>
    %61 = arith.mulf %45, %60 : vector<1x128xf32>
    %62 = arith.subf %56, %61 : vector<1x128xf32>
    %63 = vector.broadcast %60 : vector<1x128xf32> to vector<16x128xf32>
    %64 = arith.mulf %41, %63 : vector<16x128xf32>
    %65 = vector.broadcast %62 : vector<1x128xf32> to vector<16x128xf32>
    %66 = arith.addf %64, %65 : vector<16x128xf32>
    %67 = arith.truncf %66 : vector<16x128xf32> to vector<16x128xbf16>
    %cst_27 = arith.constant dense<0.000000e+00> : vector<16x128xf32>
    %68 = tpu.matmul %67, %7, %cst_27 {dimension_numbers = #tpu.dot_dimension_numbers<[1], [0], [0], [1], [0, 0, 1, 1], [], []>} : vector<16x128xbf16>, vector<128x128xbf16>, vector<16x128xf32> -> vector<16x128xf32>
    %cst_28 = arith.constant 0.00999999977 : f32
    %69 = vector.broadcast %cst_28 : f32 to vector<16x128xf32>
    %70 = arith.mulf %69, %68 : vector<16x128xf32>
    %71 = arith.maximumf %68, %70 : vector<16x128xf32>
    %cst_29 = arith.constant dense<0.000000e+00> : vector<128xf32>
    %72 = vector.multi_reduction <add>, %71, %cst_29 [0] : vector<16x128xf32> to vector<128xf32>
    %73 = vector.shape_cast %72 : vector<128xf32> to vector<1x128xf32>
    %cst_30 = arith.constant 6.250000e-02 : f32
    %74 = vector.broadcast %cst_30 : f32 to vector<1x128xf32>
    %75 = arith.mulf %73, %74 : vector<1x128xf32>
    %76 = arith.mulf %71, %71 : vector<16x128xf32>
    %cst_31 = arith.constant dense<0.000000e+00> : vector<128xf32>
    %77 = vector.multi_reduction <add>, %76, %cst_31 [0] : vector<16x128xf32> to vector<128xf32>
    %78 = vector.shape_cast %77 : vector<128xf32> to vector<1x128xf32>
    %cst_32 = arith.constant 6.250000e-02 : f32
    %79 = vector.broadcast %cst_32 : f32 to vector<1x128xf32>
    %80 = arith.mulf %78, %79 : vector<1x128xf32>
    %81 = arith.mulf %75, %75 : vector<1x128xf32>
    %82 = arith.subf %80, %81 : vector<1x128xf32>
    %cst_33 = arith.constant 0.000000e+00 : f32
    %83 = vector.broadcast %cst_33 : f32 to vector<1x128xf32>
    %84 = arith.maximumf %82, %83 : vector<1x128xf32>
    %c3 = arith.constant 3 : index
    %c0_34 = arith.constant 0 : index
    %85 = vector.load %arg2[%c3, %c0_34] : memref<7x128xf32, #tpu.memory_space<vmem>>, vector<1x128xf32>
    %c6 = arith.constant 6 : index
    %c0_35 = arith.constant 0 : index
    %86 = vector.load %arg2[%c6, %c0_35] : memref<7x128xf32, #tpu.memory_space<vmem>>, vector<1x128xf32>
    %cst_36 = arith.constant 9.99999974E-6 : f32
    %87 = vector.broadcast %cst_36 : f32 to vector<1x128xf32>
    %88 = arith.addf %84, %87 : vector<1x128xf32>
    %89 = math.rsqrt %88 : vector<1x128xf32>
    %90 = arith.mulf %85, %89 : vector<1x128xf32>
    %91 = arith.mulf %75, %90 : vector<1x128xf32>
    %92 = arith.subf %86, %91 : vector<1x128xf32>
    %93 = vector.broadcast %90 : vector<1x128xf32> to vector<16x128xf32>
    %94 = arith.mulf %71, %93 : vector<16x128xf32>
    %95 = vector.broadcast %92 : vector<1x128xf32> to vector<16x128xf32>
    %96 = arith.addf %94, %95 : vector<16x128xf32>
    %97 = arith.truncf %96 : vector<16x128xf32> to vector<16x128xbf16>
    %c0_37 = arith.constant 0 : index
    %c0_38 = arith.constant 0 : index
    %98 = vector.load %arg4[%c0_37, %c0_38] : memref<128x128xbf16, #tpu.memory_space<vmem>>, vector<128x128xbf16>
    %cst_39 = arith.constant dense<0.000000e+00> : vector<16x128xf32>
    %99 = tpu.matmul %97, %98, %cst_39 {dimension_numbers = #tpu.dot_dimension_numbers<[1], [0], [0], [1], [0, 0, 1, 1], [], []>} : vector<16x128xbf16>, vector<128x128xbf16>, vector<16x128xf32> -> vector<16x128xf32>
    %c0_40 = arith.constant 0 : index
    %c0_41 = arith.constant 0 : index
    %100 = vector.load %arg5[%c0_40, %c0_41] : memref<1x128xf32, #tpu.memory_space<vmem>>, vector<1x128xf32>
    %101 = vector.broadcast %100 : vector<1x128xf32> to vector<16x128xf32>
    %102 = arith.addf %99, %101 : vector<16x128xf32>
    %103 = arith.truncf %102 : vector<16x128xf32> to vector<16x128xbf16>
    %c0_42 = arith.constant 0 : index
    %c0_43 = arith.constant 0 : index
    %104 = vector.load %arg6[%c0_42, %c0_43] : memref<16x128xbf16, #tpu.memory_space<vmem>>, vector<16x128xbf16>
    tpu.vector_store %arg6[%c0_42, %c0_43], %103 {strides = array<i32>} : memref<16x128xbf16, #tpu.memory_space<vmem>>, vector<16x128xbf16>,
    return
  }
}

</mosaic_0001>

<llo_original>
// kernel: tpu_custom_call.1
$region0: #{tpu_custom_call.1}
  #allocation0 [shape = 'u32[]', space=smem, size = 0x4, offset = 0x4, fixed_abs, tag = 'smem constant byte address 0x4 - core index']
  #allocation1 [shape = 'u32[144,128]{1,0:T(1,128)}', space=vmem, size = 0x12000, scoped, tag = 'internal scratch']
  %s0 = inlined_call_operand.vmem [shape: bf16[16,8], index: 0, kind: input, shape index: {}]
  %s1 = inlined_call_operand.vmem [shape: bf16[8,128], index: 1, kind: input, shape index: {}]
  %s2 = inlined_call_operand.vmem [shape: f32[7,128], index: 2, kind: input, shape index: {}]
  %s3 = inlined_call_operand.hbm [shape: bf16[128,128], index: 3, kind: input, shape index: {}]
  %s4 = inlined_call_operand.hbm [shape: bf16[128,128], index: 4, kind: input, shape index: {}]
  %s5 = inlined_call_operand.vmem [shape: f32[1,128], index: 5, kind: input, shape index: {}]
  %s6 = inlined_call_operand.hbm [shape: bf16[16,128], index: 6, kind: output, shape index: {}]
  %s7 = sld [smem:[#allocation0]]
  $region42: #{tpu_custom_call.1} parent=0
    _
  %s9 = ssub.s32 1, %s7
  %s10 = scalar_select 0, %s9, %s7
  $region1: #{tpu_custom_call.1} parent=0
    #allocation2 [shape = 'u8[32768]{0}', space=vmem, size = 0x8000, scoped, tag = 'input window, operand 3, single buffered']
    #allocation3 [shape = 's32[1]{0}', space=sflag, size = 0x4, scoped, tag = 'scoped memory for tpu_custom_call.1']
    #allocation4 [shape = 's32[1]{0}', space=sflag, size = 0x4, scoped, tag = 'scoped memory for tpu_custom_call.1']
    #allocation5 [shape = 'u8[32768]{0}', space=vmem, size = 0x8000, scoped, tag = 'input window, operand 4, single buffered']
    #allocation6 [shape = 's32[1]{0}', space=sflag, size = 0x4, scoped, tag = 'scoped memory for tpu_custom_call.1']
    #allocation7 [shape = 'u8[4096]{0}', space=vmem, size = 0x1000, scoped, tag = 'output window, operand 0, single buffered']
    %11 = vsyncpa [#allocation3], 0
    %12 = vsyncpa [#allocation6], 0
    %13 = vsyncpa [#allocation4], 0
    // Predicated region
    $region2: #{tpu_custom_call.1} parent=1 // pred_check
      _
    $region3: #{tpu_custom_call.1} parent=1 // pred_check_branch
      %15 = sbr.rel (0) target = $region5
    $region4: #{tpu_custom_call.1} parent=1 // pred_region
      _
    $region5: #{tpu_custom_call.1} parent=1 // pred_fallthru
      _
    // Predicated region
    $region6: #{tpu_custom_call.1} parent=1 // pred_check
      _
    $region7: #{tpu_custom_call.1} parent=1 // pred_check_branch
      %17 = sbr.rel (0) target = $region9
    $region8: #{tpu_custom_call.1} parent=1 // pred_region
      _
    $region9: #{tpu_custom_call.1} parent=1 // pred_fallthru
      _
    // Predicated region
    $region10: #{tpu_custom_call.1} parent=1 // pred_check
      _
    $region11: #{tpu_custom_call.1} parent=1 // pred_check_branch
      %19 = sbr.rel (0) target = $region13
    $region12: #{tpu_custom_call.1} parent=1 // pred_region
      _
    $region13: #{tpu_custom_call.1} parent=1 // pred_fallthru
      _
    // Predicated region
    $region14: #{tpu_custom_call.1} parent=1 // pred_check
      _
    $region15: #{tpu_custom_call.1} parent=1 // pred_check_branch
      %21 = sbr.rel (0) target = $region17
    $region16: #{tpu_custom_call.1} parent=1 // pred_region
      %s23 = ssub.s32 1024, 1024
      %24 = vsyncadd [#allocation3], %s23
      %s25 = sshll.u32 [#allocation2], 4
      %s26 = int_to_ptr.vmem [resolvable:$true] %s25
      %31 = dma.hbm_to_vmem [thread:$0]  %s3, 1024, %s26, [#allocation3], 64, 64, 4
    $region17: #{tpu_custom_call.1} parent=1 // pred_fallthru
      _
    // Predicated region
    $region18: #{tpu_custom_call.1} parent=1 // pred_check
      _
    $region19: #{tpu_custom_call.1} parent=1 // pred_check_branch
      %33 = sbr.rel (0) target = $region21
    $region20: #{tpu_custom_call.1} parent=1 // pred_region
      %s35 = ssub.s32 1024, 1024
      %36 = vsyncadd [#allocation6], %s35
      %s37 = sshll.u32 [#allocation5], 4
      %s38 = int_to_ptr.vmem [resolvable:$true] %s37
      %43 = dma.hbm_to_vmem [thread:$0]  %s4, 1024, %s38, [#allocation6], 64, 64, 4
    $region21: #{tpu_custom_call.1} parent=1 // pred_fallthru
      _
    // Predicated region
    $region22: #{tpu_custom_call.1} parent=1 // pred_check
      _
    $region23: #{tpu_custom_call.1} parent=1 // pred_check_branch
      %45 = sbr.rel (0) target = $region25
    $region24: #{tpu_custom_call.1} parent=1 // pred_region
      _
    $region25: #{tpu_custom_call.1} parent=1 // pred_fallthru
      _
    // Predicated region
    $region26: #{tpu_custom_call.1} parent=1 // pred_check
      _
    $region27: #{tpu_custom_call.1} parent=1 // pred_check_branch
      %47 = sbr.rel (0) target = $region29
    $region28: #{tpu_custom_call.1} parent=1 // pred_region
      %48 = dma.done [#allocation3], 1024
    $region29: #{tpu_custom_call.1} parent=1 // pred_fallthru
      _
    // Predicated region
    $region30: #{tpu_custom_call.1} parent=1 // pred_check
      _
    $region31: #{tpu_custom_call.1} parent=1 // pred_check_branch
      %50 = sbr.rel (0) target = $region33
    $region32: #{tpu_custom_call.1} parent=1 // pred_region
      %51 = dma.done [#allocation6], 1024
    $region33: #{tpu_custom_call.1} parent=1 // pred_fallthru
      _
    %v53 = vld [vmem:[%s0] sm:$0xf]
    %v54 = vld [vmem:[%s0 + $0x4] sm:$0xf]
    %v55 = vld [vmem:[%s1] sm:$0xf]
    %v56 = vld [vmem:[%s2] sm:$0x1]
    %v57 = vlaneseq
    %v58 = vshrl.u32 %v57, 7
    %v59 = vsub.s32 0, %v58
    %v60 = vrot.slane %v56, %v59
    %v63 = vunpack.c.l.b16 %v53
    %v64 = vunpack.c.l.b16 %v54
    %v65 = vpack.c.b16 %v64, %v63
    %vm66 = vcmask 64512
    %v68 = vsel %vm66, %v65, 0
    %vm70 = vcmask 1043456
    %v72 = vsel %vm70, %v55, 0
    %74 = vmatprep.subr.bf16.mxu0 0
    %75 = vmatpush1.bf16.msra.mxu0 %v72
    %76 = vmatprep.subr.bf16.mxu0 0
    %77 = vmatpush1.bf16.msra.mxu0 0
    %78 = vmatprep.subr.bf16.mxu0 0
    %79 = vmatpush1.bf16.msra.mxu0 0
    %80 = vmatprep.subr.bf16.mxu0 0
    %81 = vmatpush1.bf16.msra.mxu0 0
    %82 = vmatprep.subr.bf16.mxu0 0
    %83 = vmatpush1.bf16.msra.mxu0 0
    %84 = vmatprep.subr.bf16.mxu0 0
    %85 = vmatpush1.bf16.msra.mxu0 0
    %86 = vmatprep.subr.bf16.mxu0 0
    %87 = vmatpush1.bf16.msra.mxu0 0
    %88 = vmatprep.subr.bf16.mxu0 0
    %89 = vmatpush1.bf16.msra.mxu0 0
    %90 = vmatprep.subr.bf16.mxu0 0
    %91 = vmatpush1.bf16.msra.mxu0 0
    %92 = vmatprep.subr.bf16.mxu0 0
    %93 = vmatpush1.bf16.msra.mxu0 0
    %94 = vmatprep.subr.bf16.mxu0 0
    %95 = vmatpush1.bf16.msra.mxu0 0
    %96 = vmatprep.subr.bf16.mxu0 0
    %97 = vmatpush1.bf16.msra.mxu0 0
    %98 = vmatprep.subr.bf16.mxu0 0
    %99 = vmatpush1.bf16.msra.mxu0 0
    %100 = vmatprep.subr.bf16.mxu0 0
    %101 = vmatpush1.bf16.msra.mxu0 0
    %102 = vmatprep.subr.bf16.mxu0 0
    %103 = vmatpush1.bf16.msra.mxu0 0
    %104 = vmatprep.subr.bf16.mxu0 0
    %105 = vmatpush1.bf16.msra.mxu0 0
    %106 = vmatprep.mubr.bf16.mxu0 0
    %107 = vmatmul.mubr.bf16.gmra.mrb[0].mxu0 %v68
    %v108 = vpop.f32.mrb[0].mxu0
    %v109 = vadd.f32 %v60, %v108
    %v110 = vpop.f32.mrb[0].mxu0
    %v111 = vpop.f32.mrb[0].mxu0
    %v112 = vadd.f32 %v60, %v111
    %v113 = vpop.f32.mrb[0].mxu0
    %114 = vdwg.mxu0
    %v115 = vpack.c.bf16 %v112, %v109
    %v116 = vld [vmem:[#allocation2] sm:$0xf]
    %v117 = vld [vmem:[#allocation2 + $0x4] sm:$0xf]
    %v118 = vld [vmem:[#allocation2 + $0x8] sm:$0xf]
    %v119 = vld [vmem:[#allocation2 + $0xc] sm:$0xf]
    %v120 = vld [vmem:[#allocation2 + $0x10] sm:$0xf]
    %v121 = vld [vmem:[#allocation2 + $0x14] sm:$0xf]
    %v122 = vld [vmem:[#allocation2 + $0x18] sm:$0xf]
    %v123 = vld [vmem:[#allocation2 + $0x1c] sm:$0xf]
    %v124 = vld [vmem:[#allocation2 + $0x20] sm:$0xf]
    %v125 = vld [vmem:[#allocation2 + $0x24] sm:$0xf]
    %v126 = vld [vmem:[#allocation2 + $0x28] sm:$0xf]
    %v127 = vld [vmem:[#allocation2 + $0x2c] sm:$0xf]
    %v128 = vld [vmem:[#allocation2 + $0x30] sm:$0xf]
    %v129 = vld [vmem:[#allocation2 + $0x34] sm:$0xf]
    %v130 = vld [vmem:[#allocation2 + $0x38] sm:$0xf]
    %v131 = vld [vmem:[#allocation2 + $0x3c] sm:$0xf]
    %v148 = vunpack.c.l.b16 %v116
    %v149 = vunpack.c.l.b16 %v117
    %v150 = vunpack.c.l.b16 %v118
    %v151 = vunpack.c.l.b16 %v119
    %v152 = vunpack.c.l.b16 %v120
    %v153 = vunpack.c.l.b16 %v121
    %v154 = vunpack.c.l.b16 %v122
    %v155 = vunpack.c.l.b16 %v123
    %v156 = vunpack.c.l.b16 %v124
    %v157 = vunpack.c.l.b16 %v125
    %v158 = vunpack.c.l.b16 %v126
    %v159 = vunpack.c.l.b16 %v127
    %v160 = vunpack.c.l.b16 %v128
    %v161 = vunpack.c.l.b16 %v129
    %v162 = vunpack.c.l.b16 %v130
    %v163 = vunpack.c.l.b16 %v131
    %v164 = vpack.c.b16 %v149, %v148
    %v165 = vpack.c.b16 %v151, %v150
    %v166 = vpack.c.b16 %v153, %v152
    %v167 = vpack.c.b16 %v155, %v154
    %v168 = vpack.c.b16 %v157, %v156
    %v169 = vpack.c.b16 %v159, %v158
    %v170 = vpack.c.b16 %v161, %v160
    %v171 = vpack.c.b16 %v163, %v162
    %180 = vmatprep.subr.bf16.mxu0 0
    %181 = vmatpush1.bf16.msra.mxu0 %v164
    %182 = vmatprep.subr.bf16.mxu0 0
    %183 = vmatpush1.bf16.msra.mxu0 %v165
    %184 = vmatprep.subr.bf16.mxu0 0
    %185 = vmatpush1.bf16.msra.mxu0 %v166
    %186 = vmatprep.subr.bf16.mxu0 0
    %187 = vmatpush1.bf16.msra.mxu0 %v167
    %188 = vmatprep.subr.bf16.mxu0 0
    %189 = vmatpush1.bf16.msra.mxu0 %v168
    %190 = vmatprep.subr.bf16.mxu0 0
    %191 = vmatpush1.bf16.msra.mxu0 %v169
    %192 = vmatprep.subr.bf16.mxu0 0
    %193 = vmatpush1.bf16.msra.mxu0 %v170
    %194 = vmatprep.subr.bf16.mxu0 0
    %195 = vmatpush1.bf16.msra.mxu0 %v171
    %196 = vmatprep.subr.bf16.mxu0 0
    %197 = vmatpush1.bf16.msra.mxu0 0
    %198 = vmatprep.subr.bf16.mxu0 0
    %199 = vmatpush1.bf16.msra.mxu0 0
    %200 = vmatprep.subr.bf16.mxu0 0
    %201 = vmatpush1.bf16.msra.mxu0 0
    %202 = vmatprep.subr.bf16.mxu0 0
    %203 = vmatpush1.bf16.msra.mxu0 0
    %204 = vmatprep.subr.bf16.mxu0 0
    %205 = vmatpush1.bf16.msra.mxu0 0
    %206 = vmatprep.subr.bf16.mxu0 0
    %207 = vmatpush1.bf16.msra.mxu0 0
    %208 = vmatprep.subr.bf16.mxu0 0
    %209 = vmatpush1.bf16.msra.mxu0 0
    %210 = vmatprep.subr.bf16.mxu0 0
    %211 = vmatpush1.bf16.msra.mxu0 0
    %212 = vmatprep.mubr.bf16.mxu0 0
    %213 = vmatmul.mubr.bf16.gmra.mrb[0].mxu0 %v115
    %v214 = vpop.f32.mrb[0].mxu0
    %v215 = vadd.f32 0.0, %v214
    %v216 = vpop.f32.mrb[0].mxu0
    %v217 = vpop.f32.mrb[0].mxu0
    %v218 = vadd.f32 0.0, %v217
    %v219 = vpop.f32.mrb[0].mxu0
    %220 = vdwg.mxu0
    %v221 = vmul.f32 %v215, 0.01
    %v222 = vmul.f32 %v218, 0.01
    %v223 = vmax.f32 %v215, %v221
    %v224 = vmax.f32 %v218, %v222
    %v225 = vadd.f32 %v223, %v224
    %v226 = vrot.slane %v225, 4
    %v227 = vadd.f32 %v225, %v226
    %v228 = vrot.slane %v227, 2
    %v229 = vadd.f32 %v227, %v228
    %v230 = vrot.slane %v229, 1
    %v231 = vadd.f32 %v229, %v230
    %v232 = vmul.f32 %v231, 0.0625
    %v233 = vmul.f32 %v223, %v223
    %v234 = vmul.f32 %v224, %v224
    %v235 = vadd.f32 %v233, %v234
    %v236 = vrot.slane %v235, 4
    %v237 = vadd.f32 %v235, %v236
    %v238 = vrot.slane %v237, 2
    %v239 = vadd.f32 %v237, %v238
    %v240 = vrot.slane %v239, 1
    %v241 = vadd.f32 %v239, %v240
    %v242 = vmul.f32 %v241, 0.0625
    %v243 = vmul.f32 %v232, %v232
    %v244 = vsub.f32 %v242, %v243
    %v245 = vmax.f32 %v244, 0.0
    %v246 = vld [vmem:[%s2 + $0x1] sm:$0x1]
    %v247 = vld [vmem:[%s2 + $0x4] sm:$0x1]
    %v248 = vadd.f32 %v245, 1e-05
    %v249 = vrsqrt.pop %v248
    %v250 = vmul.f32 %v246, %v249
    %v251 = vmul.f32 %v232, %v250
    %v252 = vsub.f32 %v247, %v251
    %v253 = vlaneseq
    %v254 = vshrl.u32 %v253, 7
    %v255 = vsub.s32 0, %v254
    %v256 = vrot.slane %v250, %v255
    %v257 = vmul.f32 %v223, %v256
    %v258 = vmul.f32 %v224, %v256
    %v259 = vlaneseq
    %v260 = vshrl.u32 %v259, 7
    %v261 = vsub.s32 0, %v260
    %v262 = vrot.slane %v252, %v261
    %v263 = vadd.f32 %v257, %v262
    %v264 = vadd.f32 %v258, %v262
    %v265 = vpack.c.bf16 %v264, %v263
    %266 = vmatprep.subr.bf16.mxu0 0
    %267 = vmatpush1.bf16.msra.mxu0 %v164
    %268 = vmatprep.subr.bf16.mxu0 0
    %269 = vmatpush1.bf16.msra.mxu0 %v165
    %270 = vmatprep.subr.bf16.mxu0 0
    %271 = vmatpush1.bf16.msra.mxu0 %v166
    %272 = vmatprep.subr.bf16.mxu0 0
    %273 = vmatpush1.bf16.msra.mxu0 %v167
    %274 = vmatprep.subr.bf16.mxu0 0
    %275 = vmatpush1.bf16.msra.mxu0 %v168
    %276 = vmatprep.subr.bf16.mxu0 0
    %277 = vmatpush1.bf16.msra.mxu0 %v169
    %278 = vmatprep.subr.bf16.mxu0 0
    %279 = vmatpush1.bf16.msra.mxu0 %v170
    %280 = vmatprep.subr.bf16.mxu0 0
    %281 = vmatpush1.bf16.msra.mxu0 %v171
    %282 = vmatprep.subr.bf16.mxu0 0
    %283 = vmatpush1.bf16.msra.mxu0 0
    %284 = vmatprep.subr.bf16.mxu0 0
    %285 = vmatpush1.bf16.msra.mxu0 0
    %286 = vmatprep.subr.bf16.mxu0 0
    %287 = vmatpush1.bf16.msra.mxu0 0
    %288 = vmatprep.subr.bf16.mxu0 0
    %289 = vmatpush1.bf16.msra.mxu0 0
    %290 = vmatprep.subr.bf16.mxu0 0
    %291 = vmatpush1.bf16.msra.mxu0 0
    %292 = vmatprep.subr.bf16.mxu0 0
    %293 = vmatpush1.bf16.msra.mxu0 0
    %294 = vmatprep.subr.bf16.mxu0 0
    %295 = vmatpush1.bf16.msra.mxu0 0
    %296 = vmatprep.subr.bf16.mxu0 0
    %297 = vmatpush1.bf16.msra.mxu0 0
    %298 = vmatprep.mubr.bf16.mxu0 0
    %299 = vmatmul.mubr.bf16.gmra.mrb[0].mxu0 %v265
    %v300 = vpop.f32.mrb[0].mxu0
    %v301 = vadd.f32 0.0, %v300
    %v302 = vpop.f32.mrb[0].mxu0
    %v303 = vpop.f32.mrb[0].mxu0
    %v304 = vadd.f32 0.0, %v303
    %v305 = vpop.f32.mrb[0].mxu0
    %306 = vdwg.mxu0
    %v307 = vmul.f32 %v301, 0.01
    %v308 = vmul.f32 %v304, 0.01
    %v309 = vmax.f32 %v301, %v307
    %v310 = vmax.f32 %v304, %v308
    %v311 = vadd.f32 %v309, %v310
    %v312 = vrot.slane %v311, 4
    %v313 = vadd.f32 %v311, %v312
    %v314 = vrot.slane %v313, 2
    %v315 = vadd.f32 %v313, %v314
    %v316 = vrot.slane %v315, 1
    %v317 = vadd.f32 %v315, %v316
    %v318 = vmul.f32 %v317, 0.0625
    %v319 = vmul.f32 %v309, %v309
    %v320 = vmul.f32 %v310, %v310
    %v321 = vadd.f32 %v319, %v320
    %v322 = vrot.slane %v321, 4
    %v323 = vadd.f32 %v321, %v322
    %v324 = vrot.slane %v323, 2
    %v325 = vadd.f32 %v323, %v324
    %v326 = vrot.slane %v325, 1
    %v327 = vadd.f32 %v325, %v326
    %v328 = vmul.f32 %v327, 0.0625
    %v329 = vmul.f32 %v318, %v318
    %v330 = vsub.f32 %v328, %v329
    %v331 = vmax.f32 %v330, 0.0
    %v332 = vld [vmem:[%s2 + $0x2] sm:$0x1]
    %v333 = vld [vmem:[%s2 + $0x5] sm:$0x1]
    %v334 = vadd.f32 %v331, 1e-05
    %v335 = vrsqrt.pop %v334
    %v336 = vmul.f32 %v332, %v335
    %v337 = vmul.f32 %v318, %v336
    %v338 = vsub.f32 %v333, %v337
    %v339 = vlaneseq
    %v340 = vshrl.u32 %v339, 7
    %v341 = vsub.s32 0, %v340
    %v342 = vrot.slane %v336, %v341
    %v343 = vmul.f32 %v309, %v342
    %v344 = vmul.f32 %v310, %v342
    %v345 = vlaneseq
    %v346 = vshrl.u32 %v345, 7
    %v347 = vsub.s32 0, %v346
    %v348 = vrot.slane %v338, %v347
    %v349 = vadd.f32 %v343, %v348
    %v350 = vadd.f32 %v344, %v348
    %v351 = vpack.c.bf16 %v350, %v349
    %352 = vmatprep.subr.bf16.mxu0 0
    %353 = vmatpush1.bf16.msra.mxu0 %v164
    %354 = vmatprep.subr.bf16.mxu0 0
    %355 = vmatpush1.bf16.msra.mxu0 %v165
    %356 = vmatprep.subr.bf16.mxu0 0
    %357 = vmatpush1.bf16.msra.mxu0 %v166
    %358 = vmatprep.subr.bf16.mxu0 0
    %359 = vmatpush1.bf16.msra.mxu0 %v167
    %360 = vmatprep.subr.bf16.mxu0 0
    %361 = vmatpush1.bf16.msra.mxu0 %v168
    %362 = vmatprep.subr.bf16.mxu0 0
    %363 = vmatpush1.bf16.msra.mxu0 %v169
    %364 = vmatprep.subr.bf16.mxu0 0
    %365 = vmatpush1.bf16.msra.mxu0 %v170
    %366 = vmatprep.subr.bf16.mxu0 0
    %367 = vmatpush1.bf16.msra.mxu0 %v171
    %368 = vmatprep.subr.bf16.mxu0 0
    %369 = vmatpush1.bf16.msra.mxu0 0
    %370 = vmatprep.subr.bf16.mxu0 0
    %371 = vmatpush1.bf16.msra.mxu0 0
    %372 = vmatprep.subr.bf16.mxu0 0
    %373 = vmatpush1.bf16.msra.mxu0 0
    %374 = vmatprep.subr.bf16.mxu0 0
    %375 = vmatpush1.bf16.msra.mxu0 0
    %376 = vmatprep.subr.bf16.mxu0 0
    %377 = vmatpush1.bf16.msra.mxu0 0
    %378 = vmatprep.subr.bf16.mxu0 0
    %379 = vmatpush1.bf16.msra.mxu0 0
    %380 = vmatprep.subr.bf16.mxu0 0
    %381 = vmatpush1.bf16.msra.mxu0 0
    %382 = vmatprep.subr.bf16.mxu0 0
    %383 = vmatpush1.bf16.msra.mxu0 0
    %384 = vmatprep.mubr.bf16.mxu0 0
    %385 = vmatmul.mubr.bf16.gmra.mrb[0].mxu0 %v351
    %v386 = vpop.f32.mrb[0].mxu0
    %v387 = vadd.f32 0.0, %v386
    %v388 = vpop.f32.mrb[0].mxu0
    %v389 = vpop.f32.mrb[0].mxu0
    %v390 = vadd.f32 0.0, %v389
    %v391 = vpop.f32.mrb[0].mxu0
    %392 = vdwg.mxu0
    %v393 = vmul.f32 %v387, 0.01
    %v394 = vmul.f32 %v390, 0.01
    %v395 = vmax.f32 %v387, %v393
    %v396 = vmax.f32 %v390, %v394
    %v397 = vadd.f32 %v395, %v396
    %v398 = vrot.slane %v397, 4
    %v399 = vadd.f32 %v397, %v398
    %v400 = vrot.slane %v399, 2
    %v401 = vadd.f32 %v399, %v400
    %v402 = vrot.slane %v401, 1
    %v403 = vadd.f32 %v401, %v402
    %v404 = vmul.f32 %v403, 0.0625
    %v405 = vmul.f32 %v395, %v395
    %v406 = vmul.f32 %v396, %v396
    %v407 = vadd.f32 %v405, %v406
    %v408 = vrot.slane %v407, 4
    %v409 = vadd.f32 %v407, %v408
    %v410 = vrot.slane %v409, 2
    %v411 = vadd.f32 %v409, %v410
    %v412 = vrot.slane %v411, 1
    %v413 = vadd.f32 %v411, %v412
    %v414 = vmul.f32 %v413, 0.0625
    %v415 = vmul.f32 %v404, %v404
    %v416 = vsub.f32 %v414, %v415
    %v417 = vmax.f32 %v416, 0.0
    %v418 = vld [vmem:[%s2 + $0x3] sm:$0x1]
    %v419 = vld [vmem:[%s2 + $0x6] sm:$0x1]
    %v420 = vadd.f32 %v417, 1e-05
    %v421 = vrsqrt.pop %v420
    %v422 = vmul.f32 %v418, %v421
    %v423 = vmul.f32 %v404, %v422
    %v424 = vsub.f32 %v419, %v423
    %v425 = vlaneseq
    %v426 = vshrl.u32 %v425, 7
    %v427 = vsub.s32 0, %v426
    %v428 = vrot.slane %v422, %v427
    %v429 = vmul.f32 %v395, %v428
    %v430 = vmul.f32 %v396, %v428
    %v431 = vlaneseq
    %v432 = vshrl.u32 %v431, 7
    %v433 = vsub.s32 0, %v432
    %v434 = vrot.slane %v424, %v433
    %v435 = vadd.f32 %v429, %v434
    %v436 = vadd.f32 %v430, %v434
    %v437 = vpack.c.bf16 %v436, %v435
    %v438 = vld [vmem:[#allocation5] sm:$0xf]
    %v439 = vld [vmem:[#allocation5 + $0x4] sm:$0xf]
    %v440 = vld [vmem:[#allocation5 + $0x8] sm:$0xf]
    %v441 = vld [vmem:[#allocation5 + $0xc] sm:$0xf]
    %v442 = vld [vmem:[#allocation5 + $0x10] sm:$0xf]
    %v443 = vld [vmem:[#allocation5 + $0x14] sm:$0xf]
    %v444 = vld [vmem:[#allocation5 + $0x18] sm:$0xf]
    %v445 = vld [vmem:[#allocation5 + $0x1c] sm:$0xf]
    %v446 = vld [vmem:[#allocation5 + $0x20] sm:$0xf]
    %v447 = vld [vmem:[#allocation5 + $0x24] sm:$0xf]
    %v448 = vld [vmem:[#allocation5 + $0x28] sm:$0xf]
    %v449 = vld [vmem:[#allocation5 + $0x2c] sm:$0xf]
    %v450 = vld [vmem:[#allocation5 + $0x30] sm:$0xf]
    %v451 = vld [vmem:[#allocation5 + $0x34] sm:$0xf]
    %v452 = vld [vmem:[#allocation5 + $0x38] sm:$0xf]
    %v453 = vld [vmem:[#allocation5 + $0x3c] sm:$0xf]
    %v454 = vld [vmem:[%s5] sm:$0x1]
    %v456 = vlaneseq
    %v457 = vshrl.u32 %v456, 7
    %v458 = vsub.s32 0, %v457
    %v459 = vrot.slane %v454, %v458
    %v477 = vunpack.c.l.b16 %v438
    %v478 = vunpack.c.l.b16 %v439
    %v479 = vunpack.c.l.b16 %v440
    %v480 = vunpack.c.l.b16 %v441
    %v481 = vunpack.c.l.b16 %v442
    %v482 = vunpack.c.l.b16 %v443
    %v483 = vunpack.c.l.b16 %v444
    %v484 = vunpack.c.l.b16 %v445
    %v485 = vunpack.c.l.b16 %v446
    %v486 = vunpack.c.l.b16 %v447
    %v487 = vunpack.c.l.b16 %v448
    %v488 = vunpack.c.l.b16 %v449
    %v489 = vunpack.c.l.b16 %v450
    %v490 = vunpack.c.l.b16 %v451
    %v491 = vunpack.c.l.b16 %v452
    %v492 = vunpack.c.l.b16 %v453
    %v493 = vpack.c.b16 %v478, %v477
    %v494 = vpack.c.b16 %v480, %v479
    %v495 = vpack.c.b16 %v482, %v481
    %v496 = vpack.c.b16 %v484, %v483
    %v497 = vpack.c.b16 %v486, %v485
    %v498 = vpack.c.b16 %v488, %v487
    %v499 = vpack.c.b16 %v490, %v489
    %v500 = vpack.c.b16 %v492, %v491
    %509 = vmatprep.subr.bf16.mxu0 0
    %510 = vmatpush1.bf16.msra.mxu0 %v493
    %511 = vmatprep.subr.bf16.mxu0 0
    %512 = vmatpush1.bf16.msra.mxu0 %v494
    %513 = vmatprep.subr.bf16.mxu0 0
    %514 = vmatpush1.bf16.msra.mxu0 %v495
    %515 = vmatprep.subr.bf16.mxu0 0
    %516 = vmatpush1.bf16.msra.mxu0 %v496
    %517 = vmatprep.subr.bf16.mxu0 0
    %518 = vmatpush1.bf16.msra.mxu0 %v497
    %519 = vmatprep.subr.bf16.mxu0 0
    %520 = vmatpush1.bf16.msra.mxu0 %v498
    %521 = vmatprep.subr.bf16.mxu0 0
    %522 = vmatpush1.bf16.msra.mxu0 %v499
    %523 = vmatprep.subr.bf16.mxu0 0
    %524 = vmatpush1.bf16.msra.mxu0 %v500
    %525 = vmatprep.subr.bf16.mxu0 0
    %526 = vmatpush1.bf16.msra.mxu0 0
    %527 = vmatprep.subr.bf16.mxu0 0
    %528 = vmatpush1.bf16.msra.mxu0 0
    %529 = vmatprep.subr.bf16.mxu0 0
    %530 = vmatpush1.bf16.msra.mxu0 0
    %531 = vmatprep.subr.bf16.mxu0 0
    %532 = vmatpush1.bf16.msra.mxu0 0
    %533 = vmatprep.subr.bf16.mxu0 0
    %534 = vmatpush1.bf16.msra.mxu0 0
    %535 = vmatprep.subr.bf16.mxu0 0
    %536 = vmatpush1.bf16.msra.mxu0 0
    %537 = vmatprep.subr.bf16.mxu0 0
    %538 = vmatpush1.bf16.msra.mxu0 0
    %539 = vmatprep.subr.bf16.mxu0 0
    %540 = vmatpush1.bf16.msra.mxu0 0
    %541 = vmatprep.mubr.bf16.mxu0 0
    %542 = vmatmul.mubr.bf16.gmra.mrb[0].mxu0 %v437
    %v543 = vpop.f32.mrb[0].mxu0
    %v544 = vadd.f32 %v459, %v543
    %v545 = vpop.f32.mrb[0].mxu0
    %v546 = vpop.f32.mrb[0].mxu0
    %v547 = vadd.f32 %v459, %v546
    %v548 = vpop.f32.mrb[0].mxu0
    %549 = vdwg.mxu0
    %v550 = vpack.c.bf16 %v547, %v544
    %v552 = vunpack.c.l.b16 %v550
    %v553 = vunpack.c.h.b16 %v550
    %v554 = vpack.c.b16 %v552, %v552
    %v555 = vpack.c.b16 %v553, %v553
    %558 = vst [vmem:[#allocation7] sm:$0xf] %v554
    %559 = vst [vmem:[#allocation7 + $0x4] sm:$0xf] %v555
    // Predicated region
    $region34: #{tpu_custom_call.1} parent=1 // pred_check
      _
    $region35: #{tpu_custom_call.1} parent=1 // pred_check_branch
      %561 = sbr.rel (0) target = $region37
    $region36: #{tpu_custom_call.1} parent=1 // pred_region
      %s563 = ssub.s32 128, 128
      %564 = vsyncadd [#allocation4], %s563
      %s565 = sshll.u32 [#allocation7], 4
      %s566 = int_to_ptr.vmem [resolvable:$true] %s565
      %571 = dma.vmem_to_hbm [thread:$0]  %s566, 128, %s6, [#allocation4], 64, 64, 4
    $region37: #{tpu_custom_call.1} parent=1 // pred_fallthru
      _
    // Predicated region
    $region38: #{tpu_custom_call.1} parent=1 // pred_check
      _
    $region39: #{tpu_custom_call.1} parent=1 // pred_check_branch
      %573 = sbr.rel (0) target = $region41
    $region40: #{tpu_custom_call.1} parent=1 // pred_region
      %574 = dma.done [#allocation4], 128
    $region41: #{tpu_custom_call.1} parent=1 // pred_fallthru
      _
    %575 = vsyncpa [#allocation3], 1
    %576 = vsyncpa [#allocation6], 1
    %577 = vsyncpa [#allocation4], 1

</llo_original>
